<compile_context>
chip_gen: v6e
topology: v6e:2x2x1
jax: 0.10.0
libtpu: 0.0.40
codegen_flags: <defaults>
</compile_context>

<pallas_src>
import jax
import jax.numpy as jnp
import numpy as np
from jax.experimental import pallas as pl
from jax.experimental.pallas import tpu as pltpu


def _round_up(x, m):
    return (x + m - 1) // m * m


def _pad2d(a, rows, cols):
    """Zero-pad a 2-D array up to (rows, cols); no-op if already that shape."""
    if a.shape == (rows, cols):
        return a
    return jnp.zeros((rows, cols), a.dtype).at[:a.shape[0], :a.shape[1]].set(a)


def _gelu_tanh(h):
    # tanh-approximate GELU, computed in f32 (EUP handles the tanh).
    c = jnp.float32(0.7978845608028654)  # sqrt(2/pi)
    return 0.5 * h * (1.0 + jnp.tanh(c * (h + 0.044715 * (h * h) * h)))


# ---------------- Path A: weights fully resident in VMEM --------------------
def _kernel_resident(x_ref, w_enc_ref, b_enc_ref, w_proj_ref, b_proj_ref,
                     o_ref):
    # x_ref: (TM, Dp_in)   w_enc: (Dp_in, Dp_model)  b_enc: (1, Dp_model)
    # w_proj: (Dp_model, Dp_in)  b_proj: (1, Dp_in)  o_ref: (TM, Dp_in)
    x = x_ref[...]                                   # native dtype to the MXU
    h = jnp.dot(x, w_enc_ref[...], preferred_element_type=jnp.float32)
    h = h + b_enc_ref[...].astype(jnp.float32)
    h = _gelu_tanh(h)
    y = jnp.dot(h.astype(w_proj_ref.dtype), w_proj_ref[...],
                preferred_element_type=jnp.float32)
    y = y + b_proj_ref[...].astype(jnp.float32)
    o_ref[...] = y.astype(o_ref.dtype)


# ------- Path B: model_dim chunked, f32 accumulator in VMEM scratch ---------
def _kernel_chunked(x_ref, w_enc_ref, b_enc_ref, w_proj_ref, b_proj_ref,
                    o_ref, acc_ref):
    k = pl.program_id(1)

    @pl.when(k == 0)
    def _():
        acc_ref[...] = jnp.zeros_like(acc_ref)

    h = jnp.dot(x_ref[...], w_enc_ref[...], preferred_element_type=jnp.float32)
    h = h + b_enc_ref[...].astype(jnp.float32)
    h = _gelu_tanh(h)
    acc_ref[...] += jnp.dot(h.astype(w_proj_ref.dtype), w_proj_ref[...],
                            preferred_element_type=jnp.float32)

    @pl.when(k == pl.num_programs(1) - 1)
    def _():
        o_ref[...] = (acc_ref[...]
                      + b_proj_ref[...].astype(jnp.float32)).astype(o_ref.dtype)


def masking_head_forward(x, w_enc, b_enc, w_proj, b_proj, *,
                         tm=None, k_chunk=None, compute_dtype=None):
    """x: (B, S, D_in) -> (B, S, D_in)."""
    B, S, D_in = x.shape
    D_model = w_enc.shape[1]
    M = B * S
    out_dtype = x.dtype

    # torch.nn.Linear biases are 1-D; reshape defensively to (1, D).
    b_enc = jnp.asarray(b_enc).reshape(1, -1)
    b_proj = jnp.asarray(b_proj).reshape(1, -1)

    if compute_dtype is not None:
        x = x.astype(compute_dtype)
        w_enc = w_enc.astype(compute_dtype)
        w_proj = w_proj.astype(compute_dtype)

    dt = x.dtype
    itemsize = np.dtype(dt).itemsize
    w_item = np.dtype(w_enc.dtype).itemsize
    b_item = np.dtype(b_enc.dtype).itemsize

    # Sublane-packing multiple for the row tile (f32:8, bf16:16, int8/fp8:32).
    sub = {4: 8, 2: 16, 1: 32}.get(itemsize, 8)

    # Physical VMEM for this generation (64 MiB/TC on v7x, 128 MiB v5e/v6e).
    try:
        vmem_cap = int(pltpu.get_tpu_info().vmem_capacity_bytes)
    except Exception:
        vmem_cap = 64 << 20  # conservative fallback, valid on every generation
    vmem_budget = vmem_cap - (12 << 20)

    # Lane-dense feature padding only when dims are not already 128-aligned.
    Dp_in = D_in if D_in % 128 == 0 else _round_up(D_in, 128)
    Dp_model = D_model if D_model % 128 == 0 else _round_up(D_model, 128)

    # Row tile: big on 128-MiB parts, capped on v7x; multiple of the sublane
    # packing; split so the "parallel" axis has >= 2 tiles (megacore).
    if tm is None:
        tm = 1024 if vmem_cap >= (96 << 20) else 512
    TM = min(tm, _round_up(M, sub))
    if M <= TM and M > sub:
        TM = _round_up(-(-M // 2), sub)

    def bytes_resident(tm_):
        return (2 * tm_ * Dp_in * itemsize          # x tile (double-buffered)
                + 2 * tm_ * Dp_in * itemsize        # out tile (double-buffered)
                + Dp_in * Dp_model * w_item         # w_enc  (Buffered(1))
                + Dp_model * Dp_in * w_item         # w_proj (Buffered(1))
                + (Dp_model + Dp_in) * b_item       # biases (Buffered(1))
                + tm_ * Dp_model * 4                # f32 h
                + tm_ * Dp_model * w_item           # h cast for 2nd matmul
                + tm_ * Dp_in * 4)                  # f32 y

    def bytes_chunked(tm_, tk_):
        return (2 * tm_ * Dp_in * itemsize
                + 2 * tm_ * Dp_in * itemsize
                + 2 * Dp_in * tk_ * w_item          # w_enc chunk (dbl-buf)
                + 2 * tk_ * Dp_in * w_item          # w_proj chunk (dbl-buf)
                + 2 * tk_ * b_item + Dp_in * b_item
                + tm_ * Dp_in * 4                   # f32 accumulator scratch
                + tm_ * tk_ * 4 + tm_ * tk_ * w_item)

    # Decide path: resident weights if they (plus intermediates) fit in VMEM.
    if k_chunk is not None:
        use_chunked = True
    else:
        tm_a = TM
        while tm_a > 4 * sub and bytes_resident(tm_a) > vmem_budget:
            tm_a = _round_up(tm_a // 2, sub)
        use_chunked = bytes_resident(tm_a) > vmem_budget
        if not use_chunked:
            TM = tm_a

    # Pad operands (zeros in pad cols keep the math identical; GELU(0)=0 and
    # padded weight rows/cols contribute nothing).  NOTE: the padded weights
    # depend only on the parameters — cache/hoist them across repeated calls.
    x_p = _pad2d(x.reshape(M, D_in), M, Dp_in)
    w_enc_p = _pad2d(w_enc, Dp_in, Dp_model)
    b_enc_p = _pad2d(b_enc, 1, Dp_model)
    w_proj_p = _pad2d(w_proj, Dp_model, Dp_in)
    b_proj_p = _pad2d(b_proj, 1, Dp_in)

    const1 = pl.Buffered(1)  # single-buffer the constant-index operands

    if not use_chunked:
        n_tiles = -(-M // TM)  # ragged last tile: Pallas masks OOB writes
        path_bytes = bytes_resident(TM)
        grid = (n_tiles,)
        in_specs = [
            pl.BlockSpec((TM, Dp_in), lambda i: (i, 0)),
            pl.BlockSpec((Dp_in, Dp_model), lambda i: (0, 0),
                         pipeline_mode=const1),
            pl.BlockSpec((1, Dp_model), lambda i: (0, 0),
                         pipeline_mode=const1),
            pl.BlockSpec((Dp_model, Dp_in), lambda i: (0, 0),
                         pipeline_mode=const1),
            pl.BlockSpec((1, Dp_in), lambda i: (0, 0),
                         pipeline_mode=const1),
        ]
        out_specs = pl.BlockSpec((TM, Dp_in), lambda i: (i, 0))
        scratch_shapes = []
        kernel = _kernel_resident
        dim_sem = ("parallel",)
    else:
        # Chunk size over model_dim: multiple of 128 that divides Dp_model.
        if k_chunk is not None:
            TK = _round_up(max(128, min(k_chunk, Dp_model)), 128)
            while Dp_model % TK != 0:
                TK -= 128
        else:
            TK = 128
            for cand in range(min(512, Dp_model), 127, -128):
                if Dp_model % cand == 0 and bytes_chunked(TM, cand) <= vmem_budget:
                    TK = cand
                    break
        while TM > 4 * sub and bytes_chunked(TM, TK) > vmem_budget:
            TM = _round_up(TM // 2, sub)
        n_tiles = -(-M // TM)
        path_bytes = bytes_chunked(TM, TK)
        grid = (n_tiles, Dp_model // TK)
        in_specs = [
            pl.BlockSpec((TM, Dp_in), lambda i, k: (i, 0)),
            pl.BlockSpec((Dp_in, TK), lambda i, k: (0, k)),
            pl.BlockSpec((1, TK), lambda i, k: (0, k)),
            pl.BlockSpec((TK, Dp_in), lambda i, k: (k, 0)),
            pl.BlockSpec((1, Dp_in), lambda i, k: (0, 0),
                         pipeline_mode=const1),
        ]
        out_specs = pl.BlockSpec((TM, Dp_in), lambda i, k: (i, 0))
        scratch_shapes = [pltpu.VMEM((TM, Dp_in), jnp.float32)]
        kernel = _kernel_chunked
        dim_sem = ("parallel", "arbitrary")

    vmem_limit = int(min(max(path_bytes + (16 << 20), 24 << 20),
                         vmem_cap - (4 << 20)))

    cost = pl.CostEstimate(
        flops=4 * M * Dp_in * Dp_model,            # two matmuls
        transcendentals=M * Dp_model,              # one tanh per h element
        bytes_accessed=(2 * M * Dp_in * itemsize
                        + 2 * Dp_in * Dp_model * w_item
                        + (Dp_model + Dp_in) * b_item),
    )

    out = pl.pallas_call(
        kernel,
        out_shape=jax.ShapeDtypeStruct((M, Dp_in), out_dtype),
        grid_spec=pltpu.PrefetchScalarGridSpec(
            num_scalar_prefetch=0,
            grid=grid,
            in_specs=in_specs,
            out_specs=out_specs,
            scratch_shapes=scratch_shapes,
        ),
        compiler_params=pltpu.CompilerParams(
            dimension_semantics=dim_sem,
            vmem_limit_bytes=vmem_limit,
        ),
        cost_estimate=cost,
    )(x_p, w_enc_p, b_enc_p, w_proj_p, b_proj_p)

    if Dp_in != D_in:
        out = out[:, :D_in]
    return out.reshape(B, S, D_in)


def _torch_linear_init(key, fan_in, fan_out):
    """Mimics torch.nn.Linear default init (uniform +-1/sqrt(fan_in))."""
    kw, kb = jax.random.split(key)
    bound = 1.0 / np.sqrt(fan_in)
    w = jax.random.uniform(kw, (fan_in, fan_out), jnp.float32, -bound, bound)
    b = jax.random.uniform(kb, (fan_out,), jnp.float32, -bound, bound)
    return w, b


def reference_forward(x, w_enc, b_enc, w_proj, b_proj):
    """Pure-JAX reference: Linear + GELU(tanh) + Linear."""
    h = x @ w_enc + b_enc.reshape(1, -1)
    c = 0.7978845608028654
    h = 0.5 * h * (1.0 + jnp.tanh(c * (h + 0.044715 * h ** 3)))
    return h @ w_proj + b_proj.reshape(1, -1)


if __name__ == "__main__":
    key = jax.random.PRNGKey(0)
    k_x, k_enc, k_proj, k_x2, k_enc2, k_proj2 = jax.random.split(key, 6)
    B, S = 2, 8

    # --- Test 1: resident-weight path (unaligned feature dims -> padded) ----
    input_dim, model_dim = 32, 64
    x = jax.random.normal(k_x, (B, S, input_dim), jnp.float32)
    w_enc, b_enc = _torch_linear_init(k_enc, input_dim, model_dim)
    w_proj, b_proj = _torch_linear_init(k_proj, model_dim, input_dim)

    out = jax.block_until_ready(
        masking_head_forward(x, w_enc, b_enc, w_proj, b_proj))
    ref = reference_forward(x, w_enc, b_enc, w_proj, b_proj)
    np.testing.assert_allclose(np.asarray(out), np.asarray(ref),
                               rtol=1e-4, atol=1e-4)

    # --- Test 2: model_dim-chunked path (128-aligned dims -> no padding) ----
    input_dim2, model_dim2 = 128, 256
    x2 = jax.random.normal(k_x2, (B, S, input_dim2), jnp.float32)
    w_enc2, b_enc2 = _torch_linear_init(k_enc2, input_dim2, model_dim2)
    w_proj2, b_proj2 = _torch_linear_init(k_proj2, model_dim2, input_dim2)

    out2 = jax.block_until_ready(
        masking_head_forward(x2, w_enc2, b_enc2, w_proj2, b_proj2,
                             k_chunk=128))
    ref2 = reference_forward(x2, w_enc2, b_enc2, w_proj2, b_proj2)
    np.testing.assert_allclose(np.asarray(out2), np.asarray(ref2),
                               rtol=1e-4, atol=1e-4)

    print("KERNEL_OK")
</pallas_src>

<mosaic_0001>
module attributes {stable_mosaic.version = 11 : i64} {
  func.func @_kernel_resident(%arg0: i32, %arg1: memref<8x128xf32, #tpu.memory_space<vmem>>, %arg2: memref<128x128xf32, #tpu.memory_space<vmem>>, %arg3: memref<1x128xf32, #tpu.memory_space<vmem>>, %arg4: memref<128x128xf32, #tpu.memory_space<vmem>>, %arg5: memref<1x128xf32, #tpu.memory_space<vmem>>, %arg6: memref<8x128xf32, #tpu.memory_space<vmem>>) attributes {dimension_semantics = [#tpu.dimension_semantics<parallel>], iteration_bounds = array<i64: 2>, scalar_prefetch = 0 : i64, scratch_operands = 0 : i64, tpu.core_type = #tpu.core_type<tc>, window_params = [{transform_indices = @transform_0, window_bounds = array<i64: 8, 128>}, {pipeline_mode = #tpu.pipeline_mode<synchronous>, transform_indices = @transform_1, window_bounds = array<i64: 128, 128>}, {pipeline_mode = #tpu.pipeline_mode<synchronous>, transform_indices = @transform_2, window_bounds = array<i64: 1, 128>}, {pipeline_mode = #tpu.pipeline_mode<synchronous>, transform_indices = @transform_3, window_bounds = array<i64: 128, 128>}, {pipeline_mode = #tpu.pipeline_mode<synchronous>, transform_indices = @transform_4, window_bounds = array<i64: 1, 128>}, {transform_indices = @transform_5, window_bounds = array<i64: 8, 128>}]} {
    %c0 = arith.constant 0 : index
    %c0_0 = arith.constant 0 : index
    %0 = vector.load %arg1[%c0, %c0_0] : memref<8x128xf32, #tpu.memory_space<vmem>>, vector<8x128xf32>
    %c0_1 = arith.constant 0 : index
    %c0_2 = arith.constant 0 : index
    %1 = vector.load %arg2[%c0_1, %c0_2] : memref<128x128xf32, #tpu.memory_space<vmem>>, vector<128x128xf32>
    %cst = arith.constant dense<0.000000e+00> : vector<8x128xf32>
    %2 = tpu.matmul %0, %1, %cst {dimension_numbers = #tpu.dot_dimension_numbers<[1], [0], [0], [1], [0, 0, 1, 1], [], []>} : vector<8x128xf32>, vector<128x128xf32>, vector<8x128xf32> -> vector<8x128xf32>
    %c0_3 = arith.constant 0 : index
    %c0_4 = arith.constant 0 : index
    %3 = vector.load %arg3[%c0_3, %c0_4] : memref<1x128xf32, #tpu.memory_space<vmem>>, vector<1x128xf32>
    %4 = vector.broadcast %3 : vector<1x128xf32> to vector<8x128xf32>
    %5 = arith.addf %2, %4 : vector<8x128xf32>
    %cst_5 = arith.constant 5.000000e-01 : f32
    %6 = vector.broadcast %cst_5 : f32 to vector<8x128xf32>
    %7 = arith.mulf %6, %5 : vector<8x128xf32>
    %8 = arith.mulf %5, %5 : vector<8x128xf32>
    %cst_6 = arith.constant 4.471500e-02 : f32
    %9 = vector.broadcast %cst_6 : f32 to vector<8x128xf32>
    %10 = arith.mulf %9, %8 : vector<8x128xf32>
    %11 = arith.mulf %10, %5 : vector<8x128xf32>
    %12 = arith.addf %5, %11 : vector<8x128xf32>
    %cst_7 = arith.constant 0.797884583 : f32
    %13 = vector.broadcast %cst_7 : f32 to vector<8x128xf32>
    %14 = arith.mulf %13, %12 : vector<8x128xf32>
    %15 = math.tanh %14 : vector<8x128xf32>
    %cst_8 = arith.constant 1.000000e+00 : f32
    %16 = vector.broadcast %cst_8 : f32 to vector<8x128xf32>
    %17 = arith.addf %16, %15 : vector<8x128xf32>
    %18 = arith.mulf %7, %17 : vector<8x128xf32>
    %c0_9 = arith.constant 0 : index
    %c0_10 = arith.constant 0 : index
    %19 = vector.load %arg4[%c0_9, %c0_10] : memref<128x128xf32, #tpu.memory_space<vmem>>, vector<128x128xf32>
    %cst_11 = arith.constant dense<0.000000e+00> : vector<8x128xf32>
    %20 = tpu.matmul %18, %19, %cst_11 {dimension_numbers = #tpu.dot_dimension_numbers<[1], [0], [0], [1], [0, 0, 1, 1], [], []>} : vector<8x128xf32>, vector<128x128xf32>, vector<8x128xf32> -> vector<8x128xf32>
    %c0_12 = arith.constant 0 : index
    %c0_13 = arith.constant 0 : index
    %21 = vector.load %arg5[%c0_12, %c0_13] : memref<1x128xf32, #tpu.memory_space<vmem>>, vector<1x128xf32>
    %22 = vector.broadcast %21 : vector<1x128xf32> to vector<8x128xf32>
    %23 = arith.addf %20, %22 : vector<8x128xf32>
    %c0_14 = arith.constant 0 : index
    %c0_15 = arith.constant 0 : index
    %24 = vector.load %arg6[%c0_14, %c0_15] : memref<8x128xf32, #tpu.memory_space<vmem>>, vector<8x128xf32>
    tpu.vector_store %arg6[%c0_14, %c0_15], %23 {strides = array<i32>} : memref<8x128xf32, #tpu.memory_space<vmem>>, vector<8x128xf32>,
    return
  }
  func.func @transform_0(%arg0: i32) -> (i32, i32) {
    %c0_i32 = arith.constant 0 : i32
    %c0_i32_0 = arith.constant 0 : i32
    return %arg0, %c0_i32 : i32, i32
  }
  func.func @transform_1(%arg0: i32) -> (i32, i32) {
    %c0_i32 = arith.constant 0 : i32
    %c0_i32_0 = arith.constant 0 : i32
    %c0_i32_1 = arith.constant 0 : i32
    return %c0_i32, %c0_i32_0 : i32, i32
  }
  func.func @transform_2(%arg0: i32) -> (i32, i32) {
    %c0_i32 = arith.constant 0 : i32
    %c0_i32_0 = arith.constant 0 : i32
    %c0_i32_1 = arith.constant 0 : i32
    return %c0_i32, %c0_i32_0 : i32, i32
  }
  func.func @transform_3(%arg0: i32) -> (i32, i32) {
    %c0_i32 = arith.constant 0 : i32
    %c0_i32_0 = arith.constant 0 : i32
    %c0_i32_1 = arith.constant 0 : i32
    return %c0_i32, %c0_i32_0 : i32, i32
  }
  func.func @transform_4(%arg0: i32) -> (i32, i32) {
    %c0_i32 = arith.constant 0 : i32
    %c0_i32_0 = arith.constant 0 : i32
    %c0_i32_1 = arith.constant 0 : i32
    return %c0_i32, %c0_i32_0 : i32, i32
  }
  func.func @transform_5(%arg0: i32) -> (i32, i32) {
    %c0_i32 = arith.constant 0 : i32
    %c0_i32_0 = arith.constant 0 : i32
    return %arg0, %c0_i32 : i32, i32
  }
}

</mosaic_0001>

<llo_original>
// kernel: tpu_custom_call.1
$region0: #{tpu_custom_call.1}
  #allocation0 [shape = 'u32[]', space=smem, size = 0x4, offset = 0x4, fixed_abs, tag = 'smem constant byte address 0x4 - core index']
  #allocation1 [shape = 'u32[144,128]{1,0:T(1,128)}', space=vmem, size = 0x12000, scoped, tag = 'internal scratch']
  %s0 = inlined_call_operand.hbm [shape: f32[16,128], index: 0, kind: input, shape index: {}]
  %s1 = inlined_call_operand.hbm [shape: f32[128,128], index: 1, kind: input, shape index: {}]
  %s2 = inlined_call_operand.vmem [shape: f32[1,128], index: 2, kind: input, shape index: {}]
  %s3 = inlined_call_operand.hbm [shape: f32[128,128], index: 3, kind: input, shape index: {}]
  %s4 = inlined_call_operand.vmem [shape: f32[1,128], index: 4, kind: input, shape index: {}]
  %s5 = inlined_call_operand.hbm [shape: f32[16,128], index: 5, kind: output, shape index: {}]
  %s6 = sld [smem:[#allocation0]]
  $region65: #{tpu_custom_call.1} parent=0
    _
  %s8 = ssub.s32 1, %s6
  %s9 = scalar_select 0, %s8, %s6
  $region1: #{tpu_custom_call.1} parent=0
    #allocation2 [shape = 'u8[8192]{0}', space=vmem, size = 0x2000, scoped, tag = 'input window, operand 0']
    #allocation3 [shape = 's32[2]{0}', space=sflag, size = 0x8, scoped, tag = 'scoped memory for tpu_custom_call.1']
    #allocation4 [shape = 's32[2]{0}', space=sflag, size = 0x8, scoped, tag = 'scoped memory for tpu_custom_call.1']
    #allocation5 [shape = 'u8[65536]{0}', space=vmem, size = 0x10000, scoped, tag = 'input window, operand 1, single buffered']
    #allocation6 [shape = 's32[1]{0}', space=sflag, size = 0x4, scoped, tag = 'scoped memory for tpu_custom_call.1']
    #allocation7 [shape = 'u8[65536]{0}', space=vmem, size = 0x10000, scoped, tag = 'input window, operand 3, single buffered']
    #allocation8 [shape = 'u8[8192]{0}', space=vmem, size = 0x2000, scoped, tag = 'output window, operand 0']
    %10 = vsyncpa [#allocation3], 0
    %s11 = scalar_lea.sflag [#allocation3], 1
    %12 = vsyncpa %s11, 0
    %13 = vsyncpa [#allocation6], 0
    %14 = vsyncpa [#allocation4], 0
    %s15 = scalar_lea.sflag [#allocation4], 1
    %16 = vsyncpa %s15, 0
    loop: start=0, step=1, limit=4
    $region2: #{tpu_custom_call.1} parent=1 // loop_pre_header
      _
    $region3: #{tpu_custom_call.1} parent=1 // loop_header
      %s18 = sphi 0, %s22
      %p19 = scmp.ge.s32.totalorder %s18, 4
      %s28 = sphi 0, %s30
      %s31 = sphi 0, %s28
      %s32 = sphi 0, %s31
      %s48 = sphi 0, %s32
      %s52 = sphi 0, %s52
      %s54 = sphi 0, %s52
      %s55 = sphi 0, %s54
      %s69 = sphi 0, %s55
      %s73 = sphi 0, %s73
      %s75 = sphi 0, %s73
      %s76 = sphi 0, %s75
      %s90 = sphi 0, %s76
      %s94 = sphi 0, %s94
      %s96 = sphi 0, %s94
      %s97 = sphi 0, %s96
      %s111 = sphi 0, %s97
      %s115 = sphi 0, %s115
      %s117 = sphi 0, %s115
      %s118 = sphi 0, %s117
      %s132 = sphi 0, %s118
      %s138 = sphi 0, %s140
      %s141 = sphi 0, %s138
      %s142 = sphi 0, %s141
      %s158 = sphi 0, %s142
    $region4: #{tpu_custom_call.1} parent=1 // loop_header_branch
      %21 = sbr.rel (%p19) target = $region8
    $region5: #{tpu_custom_call.1} parent=1 // loop_body
      %s23 = ssub.s32 %s18, 1
      %s24 = ssub.s32 %s18, 2
      %s25 = sadd.s32 %s18, 1
      %s26 = ssub.s32 %s18, %s25
      %p27 = scmp.eq.s32.totalorder %s26, 0
      %s29 = sadd.s32 %s28, 1
      %s30 = scalar_select %p27, %s28, %s29
      %p33 = pneg %p27
      %p34 = scmp.eq.s32.totalorder %s18, 1
      %p35 = por %p33, %p34
      %p36 = scmp.ne.s32.totalorder %s28, %s31
      %p37 = scmp.eq.s32.totalorder %s18, 0
      %p38 = por %p36, %p37
      %p39 = scmp.ne.s32.totalorder %s28, %s31
      %p40 = scmp.eq.s32.totalorder %s23, 1
      %p41 = por %p39, %p40
      %p42 = scmp.ne.s32.totalorder %s31, %s32
      %p43 = scmp.eq.s32.totalorder %s23, 0
      %p44 = por %p42, %p43
      %p45 = scmp.ne.s32.totalorder %s31, %s32
      %p46 = scmp.eq.s32.totalorder %s24, 1
      %p47 = por %p45, %p46
      %p49 = scmp.ne.s32.totalorder %s32, %s48
      %p50 = scmp.eq.s32.totalorder %s24, 0
      %p51 = por %p49, %p50
      %s53 = sadd.s32 %s52, 1
      %p56 = scmp.eq.s32.totalorder %s18, 1
      %p57 = scmp.ne.s32.totalorder %s52, %s54
      %p58 = scmp.eq.s32.totalorder %s18, 0
      %p59 = por %p57, %p58
      %p60 = scmp.ne.s32.totalorder %s52, %s54
      %p61 = scmp.eq.s32.totalorder %s23, 1
      %p62 = por %p60, %p61
      %p63 = scmp.ne.s32.totalorder %s54, %s55
      %p64 = scmp.eq.s32.totalorder %s23, 0
      %p65 = por %p63, %p64
      %p66 = scmp.ne.s32.totalorder %s54, %s55
      %p67 = scmp.eq.s32.totalorder %s24, 1
      %p68 = por %p66, %p67
      %p70 = scmp.ne.s32.totalorder %s55, %s69
      %p71 = scmp.eq.s32.totalorder %s24, 0
      %p72 = por %p70, %p71
      %s74 = sadd.s32 %s73, 1
      %p77 = scmp.eq.s32.totalorder %s18, 1
      %p78 = scmp.ne.s32.totalorder %s73, %s75
      %p79 = scmp.eq.s32.totalorder %s18, 0
      %p80 = por %p78, %p79
      %p81 = scmp.ne.s32.totalorder %s73, %s75
      %p82 = scmp.eq.s32.totalorder %s23, 1
      %p83 = por %p81, %p82
      %p84 = scmp.ne.s32.totalorder %s75, %s76
      %p85 = scmp.eq.s32.totalorder %s23, 0
      %p86 = por %p84, %p85
      %p87 = scmp.ne.s32.totalorder %s75, %s76
      %p88 = scmp.eq.s32.totalorder %s24, 1
      %p89 = por %p87, %p88
      %p91 = scmp.ne.s32.totalorder %s76, %s90
      %p92 = scmp.eq.s32.totalorder %s24, 0
      %p93 = por %p91, %p92
      %s95 = sadd.s32 %s94, 1
      %p98 = scmp.eq.s32.totalorder %s18, 1
      %p99 = scmp.ne.s32.totalorder %s94, %s96
      %p100 = scmp.eq.s32.totalorder %s18, 0
      %p101 = por %p99, %p100
      %p102 = scmp.ne.s32.totalorder %s94, %s96
      %p103 = scmp.eq.s32.totalorder %s23, 1
      %p104 = por %p102, %p103
      %p105 = scmp.ne.s32.totalorder %s96, %s97
      %p106 = scmp.eq.s32.totalorder %s23, 0
      %p107 = por %p105, %p106
      %p108 = scmp.ne.s32.totalorder %s96, %s97
      %p109 = scmp.eq.s32.totalorder %s24, 1
      %p110 = por %p108, %p109
      %p112 = scmp.ne.s32.totalorder %s97, %s111
      %p113 = scmp.eq.s32.totalorder %s24, 0
      %p114 = por %p112, %p113
      %s116 = sadd.s32 %s115, 1
      %p119 = scmp.eq.s32.totalorder %s18, 1
      %p120 = scmp.ne.s32.totalorder %s115, %s117
      %p121 = scmp.eq.s32.totalorder %s18, 0
      %p122 = por %p120, %p121
      %p123 = scmp.ne.s32.totalorder %s115, %s117
      %p124 = scmp.eq.s32.totalorder %s23, 1
      %p125 = por %p123, %p124
      %p126 = scmp.ne.s32.totalorder %s117, %s118
      %p127 = scmp.eq.s32.totalorder %s23, 0
      %p128 = por %p126, %p127
      %p129 = scmp.ne.s32.totalorder %s117, %s118
      %p130 = scmp.eq.s32.totalorder %s24, 1
      %p131 = por %p129, %p130
      %p133 = scmp.ne.s32.totalorder %s118, %s132
      %p134 = scmp.eq.s32.totalorder %s24, 0
      %p135 = por %p133, %p134
      %s136 = ssub.s32 %s18, %s25
      %p137 = scmp.eq.s32.totalorder %s136, 0
      %s139 = sadd.s32 %s138, 1
      %s140 = scalar_select %p137, %s138, %s139
      %p143 = pneg %p137
      %p144 = scmp.eq.s32.totalorder %s18, 1
      %p145 = por %p143, %p144
      %p146 = scmp.ne.s32.totalorder %s138, %s141
      %p147 = scmp.eq.s32.totalorder %s18, 0
      %p148 = por %p146, %p147
      %p149 = scmp.ne.s32.totalorder %s138, %s141
      %p150 = scmp.eq.s32.totalorder %s23, 1
      %p151 = por %p149, %p150
      %p152 = scmp.ne.s32.totalorder %s141, %s142
      %p153 = scmp.eq.s32.totalorder %s23, 0
      %p154 = por %p152, %p153
      %p155 = scmp.ne.s32.totalorder %s141, %s142
      %p156 = scmp.eq.s32.totalorder %s24, 1
      %p157 = por %p155, %p156
      %p159 = scmp.ne.s32.totalorder %s142, %s158
      %p160 = scmp.eq.s32.totalorder %s24, 0
      %p161 = por %p159, %p160
      %p162 = scmp.le.s32.totalorder 1, %s18
      %p163 = scmp.lt.s32.totalorder %s18, 3
      %p164 = pnand %p162, %p163
      %p165 = pneg %p164
      // Predicated region
      $region9: #{tpu_custom_call.1} parent=5 // pred_check
        _
      $region10: #{tpu_custom_call.1} parent=5 // pred_check_branch
        %167 = sbr.rel (%p164) target = $region12
      $region11: #{tpu_custom_call.1} parent=5 // pred_region
        %s168 = ssub.s32 %s18, 1
        // Predicated region
        $region13: #{tpu_custom_call.1} parent=11 // pred_check
          %p169 = pneg %p65
        $region14: #{tpu_custom_call.1} parent=11 // pred_check_branch
          %171 = sbr.rel (%p169) target = $region16
        $region15: #{tpu_custom_call.1} parent=11 // pred_region
          %s173 = ssub.s32 2048, 2048
          %174 = vsyncadd [#allocation6], %s173
          %s175 = sshll.u32 [#allocation5], 4
          %s176 = int_to_ptr.vmem [resolvable:$true] %s175
          %181 = dma.hbm_to_vmem [thread:$0]  %s1, 2048, %s176, [#allocation6], 128, 128, 8
        $region16: #{tpu_custom_call.1} parent=11 // pred_fallthru
          _
        // Predicated region
        $region17: #{tpu_custom_call.1} parent=11 // pred_check
          %p182 = pneg %p86
        $region18: #{tpu_custom_call.1} parent=11 // pred_check_branch
          %184 = sbr.rel (%p182) target = $region20
        $region19: #{tpu_custom_call.1} parent=11 // pred_region
          _
        $region20: #{tpu_custom_call.1} parent=11 // pred_fallthru
          _
        // Predicated region
        $region21: #{tpu_custom_call.1} parent=11 // pred_check
          %p185 = pneg %p107
        $region22: #{tpu_custom_call.1} parent=11 // pred_check_branch
          %187 = sbr.rel (%p185) target = $region24
        $region23: #{tpu_custom_call.1} parent=11 // pred_region
          %s189 = ssub.s32 2048, 2048
          %190 = vsyncadd [#allocation6], %s189
          %s191 = sshll.u32 [#allocation7], 4
          %s192 = int_to_ptr.vmem [resolvable:$true] %s191
          %197 = dma.hbm_to_vmem [thread:$0]  %s3, 2048, %s192, [#allocation6], 128, 128, 8
        $region24: #{tpu_custom_call.1} parent=11 // pred_fallthru
          _
        // Predicated region
        $region25: #{tpu_custom_call.1} parent=11 // pred_check
          %p198 = pneg %p128
        $region26: #{tpu_custom_call.1} parent=11 // pred_check_branch
          %200 = sbr.rel (%p198) target = $region28
        $region27: #{tpu_custom_call.1} parent=11 // pred_region
          _
        $region28: #{tpu_custom_call.1} parent=11 // pred_fallthru
          _
      $region12: #{tpu_custom_call.1} parent=5 // pred_fallthru
        _
      %p201 = scmp.lt.s32.totalorder %s18, 2
      // Predicated region
      $region29: #{tpu_custom_call.1} parent=5 // pred_check
        %p202 = pneg %p201
      $region30: #{tpu_custom_call.1} parent=5 // pred_check_branch
        %204 = sbr.rel (%p202) target = $region32
      $region31: #{tpu_custom_call.1} parent=5 // pred_region
        // Predicated region
        $region33: #{tpu_custom_call.1} parent=31 // pred_check
          %p205 = pneg %p38
        $region34: #{tpu_custom_call.1} parent=31 // pred_check_branch
          %207 = sbr.rel (%p205) target = $region36
        $region35: #{tpu_custom_call.1} parent=31 // pred_region
          %s208 = sand.u32 %s28, 1
          %s209 = scalar_lea.sflag [#allocation3], %s208
          %s210 = sand.u32 %s28, 1
          %s211 = smul.addr %s210, 8
          %s212 = scalar_lea.vmem [#allocation2], %s211
          %s214 = ssub.s32 128, 128
          %215 = vsyncadd %s209, %s214
          %s216 = smul.addr %s18, 128
          %s217 = scalar_lea.hbm %s0, %s216
          %s219 = sshll.u32 %s212, 4
          %s220 = int_to_ptr.vmem [resolvable:$true] %s219
          %222 = dma.hbm_to_vmem [thread:$0]  %s217, 128, %s220, %s209
        $region36: #{tpu_custom_call.1} parent=31 // pred_fallthru
          _
      $region32: #{tpu_custom_call.1} parent=5 // pred_fallthru
        _
      %p223 = scmp.le.s32.totalorder 1, %s18
      %p224 = scmp.lt.s32.totalorder %s18, 3
      %p225 = pnand %p223, %p224
      %p226 = pneg %p225
      // Predicated region
      $region37: #{tpu_custom_call.1} parent=5 // pred_check
        _
      $region38: #{tpu_custom_call.1} parent=5 // pred_check_branch
        %228 = sbr.rel (%p225) target = $region40
      $region39: #{tpu_custom_call.1} parent=5 // pred_region
        %s229 = ssub.s32 %s18, 1
        %s230 = sand.u32 %s31, 1
        %s231 = scalar_lea.sflag [#allocation3], %s230
        %s232 = sand.u32 %s31, 1
        %s233 = smul.addr %s232, 8
        %s234 = scalar_lea.vmem [#allocation2], %s233
        // Predicated region
        $region41: #{tpu_custom_call.1} parent=39 // pred_check
          %p235 = pneg %p44
        $region42: #{tpu_custom_call.1} parent=39 // pred_check_branch
          %237 = sbr.rel (%p235) target = $region44
        $region43: #{tpu_custom_call.1} parent=39 // pred_region
          %238 = dma.done %s231, 128
        $region44: #{tpu_custom_call.1} parent=39 // pred_fallthru
          _
        // Predicated region
        $region45: #{tpu_custom_call.1} parent=39 // pred_check
          %p239 = pneg %p65
        $region46: #{tpu_custom_call.1} parent=39 // pred_check_branch
          %241 = sbr.rel (%p239) target = $region48
        $region47: #{tpu_custom_call.1} parent=39 // pred_region
          %242 = dma.done [#allocation6], 2048
        $region48: #{tpu_custom_call.1} parent=39 // pred_fallthru
          _
        // Predicated region
        $region49: #{tpu_custom_call.1} parent=39 // pred_check
          %p243 = pneg %p107
        $region50: #{tpu_custom_call.1} parent=39 // pred_check_branch
          %245 = sbr.rel (%p243) target = $region52
        $region51: #{tpu_custom_call.1} parent=39 // pred_region
          %246 = dma.done [#allocation6], 2048
        $region52: #{tpu_custom_call.1} parent=39 // pred_fallthru
          _
        %s247 = sand.u32 %s31, 1
        %s248 = scalar_lea.sflag [#allocation3], %s247
        %s249 = sand.u32 %s31, 1
        %s250 = smul.addr %s249, 8
        %s251 = scalar_lea.vmem [#allocation2], %s250
        %p252 = pneg %p44
        %p253 = pneg %p41
        %p254 = pneg %p65
        %p255 = pneg %p62
        %p256 = pneg %p86
        %p257 = pneg %p83
        %p258 = pneg %p107
        %p259 = pneg %p104
        %p260 = pneg %p128
        %p261 = pneg %p125
        %p262 = pneg %p154
        %p263 = pneg %p151
        %s264 = sand.u32 %s141, 1
        %s265 = scalar_lea.sflag [#allocation4], %s264
        %s266 = sand.u32 %s141, 1
        %s267 = smul.addr %s266, 8
        %s268 = scalar_lea.vmem [#allocation8], %s267
        %v269 = vld [vmem:[%s234] sm:$0xff]
        %v270 = vld [vmem:[#allocation5] sm:$0xff]
        %v271 = vld [vmem:[#allocation5 + $0x8] sm:$0xff]
        %v272 = vld [vmem:[#allocation5 + $0x10] sm:$0xff]
        %v273 = vld [vmem:[#allocation5 + $0x18] sm:$0xff]
        %v274 = vld [vmem:[#allocation5 + $0x20] sm:$0xff]
        %v275 = vld [vmem:[#allocation5 + $0x28] sm:$0xff]
        %v276 = vld [vmem:[#allocation5 + $0x30] sm:$0xff]
        %v277 = vld [vmem:[#allocation5 + $0x38] sm:$0xff]
        %v278 = vld [vmem:[#allocation5 + $0x40] sm:$0xff]
        %v279 = vld [vmem:[#allocation5 + $0x48] sm:$0xff]
        %v280 = vld [vmem:[#allocation5 + $0x50] sm:$0xff]
        %v281 = vld [vmem:[#allocation5 + $0x58] sm:$0xff]
        %v282 = vld [vmem:[#allocation5 + $0x60] sm:$0xff]
        %v283 = vld [vmem:[#allocation5 + $0x68] sm:$0xff]
        %v284 = vld [vmem:[#allocation5 + $0x70] sm:$0xff]
        %v285 = vld [vmem:[#allocation5 + $0x78] sm:$0xff]
        %v286 = vld [vmem:[%s2] sm:$0x1]
        %v288 = vlaneseq
        %v289 = vshrl.u32 %v288, 7
        %v290 = vsub.s32 0, %v289
        %v291 = vrot.slane %v286, %v290
        %293 = vmatprep.subr.mxu0 0.0
        %294 = vmatpush1.msra.mxu0 %v285
        %295 = vmatprep.subr.mxu0 0.0
        %296 = vmatpush1.msra.mxu0 %v284
        %297 = vmatprep.subr.mxu0 0.0
        %298 = vmatpush1.msra.mxu0 %v283
        %299 = vmatprep.subr.mxu0 0.0
        %300 = vmatpush1.msra.mxu0 %v282
        %301 = vmatprep.subr.mxu0 0.0
        %302 = vmatpush1.msra.mxu0 %v281
        %303 = vmatprep.subr.mxu0 0.0
        %304 = vmatpush1.msra.mxu0 %v280
        %305 = vmatprep.subr.mxu0 0.0
        %306 = vmatpush1.msra.mxu0 %v279
        %307 = vmatprep.subr.mxu0 0.0
        %308 = vmatpush1.msra.mxu0 %v278
        %309 = vmatprep.subr.mxu0 0.0
        %310 = vmatpush1.msra.mxu0 %v277
        %311 = vmatprep.subr.mxu0 0.0
        %312 = vmatpush1.msra.mxu0 %v276
        %313 = vmatprep.subr.mxu0 0.0
        %314 = vmatpush1.msra.mxu0 %v275
        %315 = vmatprep.subr.mxu0 0.0
        %316 = vmatpush1.msra.mxu0 %v274
        %317 = vmatprep.subr.mxu0 0.0
        %318 = vmatpush1.msra.mxu0 %v273
        %319 = vmatprep.subr.mxu0 0.0
        %320 = vmatpush1.msra.mxu0 %v272
        %321 = vmatprep.subr.mxu0 0.0
        %322 = vmatpush1.msra.mxu0 %v271
        %323 = vmatprep.subr.mxu0 0.0
        %324 = vmatpush1.msra.mxu0 %v270
        %325 = vmatprep.subr.mxu0 0.0
        %326 = vmatpush2.msra.mxu0 0.0
        %327 = vmatprep.subr.mxu0 0.0
        %328 = vmatpush2.msra.mxu0 0.0
        %329 = vmatprep.subr.mxu0 0.0
        %330 = vmatpush2.msra.mxu0 0.0
        %331 = vmatprep.subr.mxu0 0.0
        %332 = vmatpush2.msra.mxu0 0.0
        %333 = vmatprep.subr.mxu0 0.0
        %334 = vmatpush2.msra.mxu0 0.0
        %335 = vmatprep.subr.mxu0 0.0
        %336 = vmatpush2.msra.mxu0 0.0
        %337 = vmatprep.subr.mxu0 0.0
        %338 = vmatpush2.msra.mxu0 0.0
        %339 = vmatprep.subr.mxu0 0.0
        %340 = vmatpush2.msra.mxu0 0.0
        %341 = vmatprep.subr.mxu0 0.0
        %342 = vmatpush2.msra.mxu0 0.0
        %343 = vmatprep.subr.mxu0 0.0
        %344 = vmatpush2.msra.mxu0 0.0
        %345 = vmatprep.subr.mxu0 0.0
        %346 = vmatpush2.msra.mxu0 0.0
        %347 = vmatprep.subr.mxu0 0.0
        %348 = vmatpush2.msra.mxu0 0.0
        %349 = vmatprep.subr.mxu0 0.0
        %350 = vmatpush2.msra.mxu0 0.0
        %351 = vmatprep.subr.mxu0 0.0
        %352 = vmatpush2.msra.mxu0 0.0
        %353 = vmatprep.subr.mxu0 0.0
        %354 = vmatpush2.msra.mxu0 0.0
        %355 = vmatprep.subr.mxu0 0.0
        %356 = vmatpush2.msra.mxu0 0.0
        %357 = vmatprep.mubr.f32.mxu0 0.0
        %358 = vmatmul.mubr.f32.gmra.mxu0 %v269
        %v359 = vpop.f32.mrf.mxu0
        %v360 = vadd.f32 %v291, %v359
        %v361 = vpop.f32.mrf.mxu0
        %362 = vdwg.mxu0
        %v363 = vmul.f32 %v360, 0.5
        %v364 = vmul.f32 %v360, %v360
        %v365 = vmul.f32 %v364, 0.044715
        %v366 = vmul.f32 %v365, %v360
        %v367 = vadd.f32 %v360, %v366
        %v368 = vmul.f32 %v367, 0.7978846
        %v369 = vtanh.pop %v368
        %v370 = vadd.f32 %v369, 1.0
        %v371 = vmul.f32 %v363, %v370
        %v372 = vld [vmem:[#allocation7] sm:$0xff]
        %v373 = vld [vmem:[#allocation7 + $0x8] sm:$0xff]
        %v374 = vld [vmem:[#allocation7 + $0x10] sm:$0xff]
        %v375 = vld [vmem:[#allocation7 + $0x18] sm:$0xff]
        %v376 = vld [vmem:[#allocation7 + $0x20] sm:$0xff]
        %v377 = vld [vmem:[#allocation7 + $0x28] sm:$0xff]
        %v378 = vld [vmem:[#allocation7 + $0x30] sm:$0xff]
        %v379 = vld [vmem:[#allocation7 + $0x38] sm:$0xff]
        %v380 = vld [vmem:[#allocation7 + $0x40] sm:$0xff]
        %v381 = vld [vmem:[#allocation7 + $0x48] sm:$0xff]
        %v382 = vld [vmem:[#allocation7 + $0x50] sm:$0xff]
        %v383 = vld [vmem:[#allocation7 + $0x58] sm:$0xff]
        %v384 = vld [vmem:[#allocation7 + $0x60] sm:$0xff]
        %v385 = vld [vmem:[#allocation7 + $0x68] sm:$0xff]
        %v386 = vld [vmem:[#allocation7 + $0x70] sm:$0xff]
        %v387 = vld [vmem:[#allocation7 + $0x78] sm:$0xff]
        %v388 = vld [vmem:[%s4] sm:$0x1]
        %v390 = vlaneseq
        %v391 = vshrl.u32 %v390, 7
        %v392 = vsub.s32 0, %v391
        %v393 = vrot.slane %v388, %v392
        %395 = vmatprep.subr.mxu0 0.0
        %396 = vmatpush1.msra.mxu0 %v387
        %397 = vmatprep.subr.mxu0 0.0
        %398 = vmatpush1.msra.mxu0 %v386
        %399 = vmatprep.subr.mxu0 0.0
        %400 = vmatpush1.msra.mxu0 %v385
        %401 = vmatprep.subr.mxu0 0.0
        %402 = vmatpush1.msra.mxu0 %v384
        %403 = vmatprep.subr.mxu0 0.0
        %404 = vmatpush1.msra.mxu0 %v383
        %405 = vmatprep.subr.mxu0 0.0
        %406 = vmatpush1.msra.mxu0 %v382
        %407 = vmatprep.subr.mxu0 0.0
        %408 = vmatpush1.msra.mxu0 %v381
        %409 = vmatprep.subr.mxu0 0.0
        %410 = vmatpush1.msra.mxu0 %v380
        %411 = vmatprep.subr.mxu0 0.0
        %412 = vmatpush1.msra.mxu0 %v379
        %413 = vmatprep.subr.mxu0 0.0
        %414 = vmatpush1.msra.mxu0 %v378
        %415 = vmatprep.subr.mxu0 0.0
        %416 = vmatpush1.msra.mxu0 %v377
        %417 = vmatprep.subr.mxu0 0.0
        %418 = vmatpush1.msra.mxu0 %v376
        %419 = vmatprep.subr.mxu0 0.0
        %420 = vmatpush1.msra.mxu0 %v375
        %421 = vmatprep.subr.mxu0 0.0
        %422 = vmatpush1.msra.mxu0 %v374
        %423 = vmatprep.subr.mxu0 0.0
        %424 = vmatpush1.msra.mxu0 %v373
        %425 = vmatprep.subr.mxu0 0.0
        %426 = vmatpush1.msra.mxu0 %v372
        %427 = vmatprep.subr.mxu0 0.0
        %428 = vmatpush2.msra.mxu0 0.0
        %429 = vmatprep.subr.mxu0 0.0
        %430 = vmatpush2.msra.mxu0 0.0
        %431 = vmatprep.subr.mxu0 0.0
        %432 = vmatpush2.msra.mxu0 0.0
        %433 = vmatprep.subr.mxu0 0.0
        %434 = vmatpush2.msra.mxu0 0.0
        %435 = vmatprep.subr.mxu0 0.0
        %436 = vmatpush2.msra.mxu0 0.0
        %437 = vmatprep.subr.mxu0 0.0
        %438 = vmatpush2.msra.mxu0 0.0
        %439 = vmatprep.subr.mxu0 0.0
        %440 = vmatpush2.msra.mxu0 0.0
        %441 = vmatprep.subr.mxu0 0.0
        %442 = vmatpush2.msra.mxu0 0.0
        %443 = vmatprep.subr.mxu0 0.0
        %444 = vmatpush2.msra.mxu0 0.0
        %445 = vmatprep.subr.mxu0 0.0
        %446 = vmatpush2.msra.mxu0 0.0
        %447 = vmatprep.subr.mxu0 0.0
        %448 = vmatpush2.msra.mxu0 0.0
        %449 = vmatprep.subr.mxu0 0.0
        %450 = vmatpush2.msra.mxu0 0.0
        %451 = vmatprep.subr.mxu0 0.0
        %452 = vmatpush2.msra.mxu0 0.0
        %453 = vmatprep.subr.mxu0 0.0
        %454 = vmatpush2.msra.mxu0 0.0
        %455 = vmatprep.subr.mxu0 0.0
        %456 = vmatpush2.msra.mxu0 0.0
        %457 = vmatprep.subr.mxu0 0.0
        %458 = vmatpush2.msra.mxu0 0.0
        %459 = vmatprep.mubr.f32.mxu0 0.0
        %460 = vmatmul.mubr.f32.gmra.mxu0 %v371
        %v461 = vpop.f32.mrf.mxu0
        %v462 = vadd.f32 %v393, %v461
        %v463 = vpop.f32.mrf.mxu0
        %464 = vdwg.mxu0
        %465 = vst [vmem:[%s268] sm:$0xff] %v462
        %s466 = sand.u32 %s141, 1
        %s467 = scalar_lea.sflag [#allocation4], %s466
        %s468 = sand.u32 %s141, 1
        %s469 = smul.addr %s468, 8
        %s470 = scalar_lea.vmem [#allocation8], %s469
        // Predicated region
        $region53: #{tpu_custom_call.1} parent=39 // pred_check
          %p471 = pneg %p151
        $region54: #{tpu_custom_call.1} parent=39 // pred_check_branch
          %473 = sbr.rel (%p471) target = $region56
        $region55: #{tpu_custom_call.1} parent=39 // pred_region
          %s475 = ssub.s32 128, 128
          %476 = vsyncadd %s467, %s475
          %s477 = smul.addr %s23, 128
          %s478 = scalar_lea.hbm %s5, %s477
          %s480 = sshll.u32 %s470, 4
          %s481 = int_to_ptr.vmem [resolvable:$true] %s480
          %483 = dma.vmem_to_hbm [thread:$0]  %s481, 128, %s478, %s467
        $region56: #{tpu_custom_call.1} parent=39 // pred_fallthru
          _
      $region40: #{tpu_custom_call.1} parent=5 // pred_fallthru
        _
      %p484 = scmp.le.s32.totalorder 2, %s18
      // Predicated region
      $region57: #{tpu_custom_call.1} parent=5 // pred_check
        %p485 = pneg %p484
      $region58: #{tpu_custom_call.1} parent=5 // pred_check_branch
        %487 = sbr.rel (%p485) target = $region60
      $region59: #{tpu_custom_call.1} parent=5 // pred_region
        %s488 = ssub.s32 %s18, 2
        // Predicated region
        $region61: #{tpu_custom_call.1} parent=59 // pred_check
          %p489 = pneg %p157
        $region62: #{tpu_custom_call.1} parent=59 // pred_check_branch
          %491 = sbr.rel (%p489) target = $region64
        $region63: #{tpu_custom_call.1} parent=59 // pred_region
          %s492 = sand.u32 %s142, 1
          %s493 = scalar_lea.sflag [#allocation4], %s492
          %s494 = sand.u32 %s142, 1
          %s495 = smul.addr %s494, 8
          %s496 = scalar_lea.vmem [#allocation8], %s495
          %497 = dma.done %s493, 128
        $region64: #{tpu_custom_call.1} parent=59 // pred_fallthru
          _
      $region60: #{tpu_custom_call.1} parent=5 // pred_fallthru
        _
    $region6: #{tpu_custom_call.1} parent=1 // loop_footer
      %s22 = sadd.s32 1, %s18
    $region7: #{tpu_custom_call.1} parent=1 // loop_footer_branch
      %17 = sbr.rel target = $region3
    $region8: #{tpu_custom_call.1} parent=1 // loop_exit
      _
    %498 = vsyncpa [#allocation3], 1
    %s499 = scalar_lea.sflag [#allocation3], 1
    %500 = vsyncpa %s499, 1
    %501 = vsyncpa [#allocation6], 1
    %502 = vsyncpa [#allocation4], 1
    %s503 = scalar_lea.sflag [#allocation4], 1
    %504 = vsyncpa %s503, 1

</llo_original>
